<compile_context>
chip_gen: v7x
topology: tpu7x:2x2x1
jax: 0.10.0
libtpu: 0.0.40
codegen_flags: <defaults>
</compile_context>

<pallas_src>
import functools

import jax
import jax.numpy as jnp
from jax import lax
from jax.experimental import pallas as pl
from jax.experimental.pallas import tpu as pltpu


def _round_up(v, m):
    return (v + m - 1) // m * m


def _cdiv(a, b):
    return (a + b - 1) // b


def _vmem_capacity_bytes():
    """Per-TensorCore VMEM capacity; conservative (v7x) fallback."""
    try:
        cap = int(pltpu.get_tpu_info().vmem_capacity_bytes)
        if cap > 0:
            return cap
    except Exception:
        pass
    return 64 * 1024 * 1024


def _derive_tiles(P, per_col_bytes, vmem_budget_bytes, tp_cap=8192):
    """Pick lane tile TP and tile count from a VMEM budget.

    Ensures TP is a multiple of 128, num_tiles >= 2 when possible (megacore),
    and the last tile isn't mostly padding.
    """
    tp_max = max(128, (vmem_budget_bytes // max(per_col_bytes, 1)) // 128 * 128)
    tp_target = max(128, min(_round_up(tp_cap, 128), tp_max))
    n_tiles = max(2, _cdiv(P, tp_target))
    tp = min(tp_target, _round_up(_cdiv(P, n_tiles), 128))
    num_tiles = _cdiv(P, tp)
    if num_tiles < 2 and P > 128:
        tp = _round_up(_cdiv(P, 2), 128)
        num_tiles = _cdiv(P, tp)
    return tp, num_tiles


def _tent_weights(coord, n, tp):
    """Bilinear corner weights: row i gets max(0, 1 - |i - coord|).

    coord: (1, TP) continuous (unnormalized) index.  Returns (n, TP) float32.
    Out-of-range coords naturally get <=1 nonzero row (zero-padding semantics).
    """
    iota = lax.broadcasted_iota(jnp.int32, (n, tp), 0).astype(jnp.float32)
    return jnp.maximum(0.0, 1.0 - jnp.abs(iota - coord))


def _gs_kernel_combined(g_ref, lr_ref, o_ref, *, H0, W0, W0p):
    # g_ref : (2, TP)           row 0 = y (height) coord, row 1 = x (width)
    # lr_ref: (C2p, H0*W0p)     row c = flattened (H0, W0p) image of channel c
    # o_ref : (C2p, TP)
    TP = o_ref.shape[-1]
    # align_corners=True unnormalization (uses TRUE H0/W0, not padded)
    iy = (g_ref[0:1, :] + 1.0) * (0.5 * (H0 - 1))
    ix = (g_ref[1:2, :] + 1.0) * (0.5 * (W0 - 1))
    oy = _tent_weights(iy, H0, TP)                      # (H0,  TP)
    ox = _tent_weights(ix, W0p, TP)                     # (W0p, TP)
    # Outer product -> per-pixel corner matrix; W0p % 8 == 0 keeps the reshape
    # a pure reinterpretation (no relayout).
    omat = (oy[:, None, :] * ox[None, :, :]).reshape(H0 * W0p, TP)
    # Single MXU contraction over all H0*W0p corners for every channel.
    o_ref[...] = jnp.dot(lr_ref[...], omat, preferred_element_type=jnp.float32)


def _gs_kernel_separable(g_ref, lr_ref, o_ref, *, H0, W0, W0p, C2p):
    # g_ref : (2, TP)
    # lr_ref: (H0*C2p, W0p)     row h*C2p + c = low-res row h of channel c
    # o_ref : (C2p, TP)
    TP = o_ref.shape[-1]
    iy = (g_ref[0:1, :] + 1.0) * (0.5 * (H0 - 1))
    ix = (g_ref[1:2, :] + 1.0) * (0.5 * (W0 - 1))
    oy = _tent_weights(iy, H0, TP)                      # (H0,  TP)
    ox = _tent_weights(ix, W0p, TP)                     # (W0p, TP)
    # Width contraction on the MXU.
    tmp = jnp.dot(lr_ref[...], ox, preferred_element_type=jnp.float32)  # (H0*C2p, TP)
    # Height contraction on the VPU (C2p % 8 == 0 -> layout-free reshape).
    tmp = tmp.reshape(H0, C2p, TP) * oy[:, None, :]
    o_ref[...] = jnp.sum(tmp, axis=0)


def grid_sample_complex(x, lr_real, lr_imag, *, tile_p=None):
    """x: (N, Hout, Wout, 2) float grid; lr_*: (1, C, H0, W0) float.

    Returns (N, C, Hout, Wout) complex64.
    """
    N, Hout, Wout, two = x.shape
    assert two == 2
    _, C, H0, W0 = lr_real.shape
    C2 = 2 * C
    C2p = _round_up(C2, 8)     # sublane-aligned channel count
    W0p = _round_up(W0, 8)     # sublane-aligned width (zero padded in LHS)
    P = N * Hout * Wout

    # torch.flip(x, dims=(-1,)) then grid_sample (grid[...,0]=x/width,
    # grid[...,1]=y/height) means: width coord = x[..., 1], height = x[..., 0].
    gy = x[..., 0].reshape(1, P)
    gx = x[..., 1].reshape(1, P)
    coords = jnp.concatenate([gy, gx], axis=0).astype(jnp.float32)       # (2, P)

    # Pack (real, imag) channels into one LHS; pad channels and width with 0.
    lr = jnp.concatenate(
        [lr_real.reshape(C, H0, W0), lr_imag.reshape(C, H0, W0)], axis=0
    ).astype(jnp.float32)                                                # (C2, H0, W0)
    lr = jnp.pad(lr, ((0, C2p - C2), (0, 0), (0, W0p - W0)))             # (C2p, H0, W0p)

    use_combined = W0 < 2 * C2
    if use_combined:
        lhs = lr.reshape(C2p, H0 * W0p)
        kernel = functools.partial(_gs_kernel_combined, H0=H0, W0=W0, W0p=W0p)
        # f32 bytes of VMEM per output column (double-buffered in/out blocks,
        # outer-product temp x2 conservatively, tents, slack).
        per_col = 4 * (2 * 2 + 2 * C2p + 2 * H0 * W0p + H0 + W0p + 8)
        flops_per_col = 2 * C2p * H0 * W0p + H0 * W0p + 4 * (H0 + W0p) + 16
    else:
        lhs = jnp.transpose(lr, (1, 0, 2)).reshape(H0 * C2p, W0p)
        kernel = functools.partial(
            _gs_kernel_separable, H0=H0, W0=W0, W0p=W0p, C2p=C2p)
        per_col = 4 * (2 * 2 + 2 * C2p + 2 * H0 * C2p + H0 + W0p + 8)
        flops_per_col = 2 * C2p * H0 * W0p + 3 * H0 * C2p + 4 * (H0 + W0p) + 16

    # Per-generation VMEM budgeting: ~48 MiB on v7x (64 MiB VMEM), up to
    # ~96 MiB on v5e/v6e (128 MiB VMEM).
    vmem_cap = _vmem_capacity_bytes()
    budget = min(int(0.75 * vmem_cap), 96 * 1024 * 1024)
    tp, num_tiles = _derive_tiles(P, per_col, budget, tp_cap=(tile_p or 8192))
    p_pad = num_tiles * tp
    if p_pad != P:
        # Padded columns sample grid coord (0, 0) -> finite values, sliced off.
        coords = jnp.pad(coords, ((0, 0), (0, p_pad - P)))

    vmem_limit = int(max(32 * 1024 * 1024,
                         min(budget + 8 * 1024 * 1024, int(0.9 * vmem_cap))))

    out = pl.pallas_call(
        kernel,
        out_shape=jax.ShapeDtypeStruct((C2p, p_pad), jnp.float32),
        grid=(num_tiles,),
        in_specs=[
            pl.BlockSpec((2, tp), lambda t: (0, t)),
            pl.BlockSpec(lhs.shape, lambda t: (0, 0)),   # resident across tiles
        ],
        out_specs=pl.BlockSpec((C2p, tp), lambda t: (0, t)),
        compiler_params=pltpu.CompilerParams(
            dimension_semantics=("parallel",),
            vmem_limit_bytes=vmem_limit,
        ),
        cost_estimate=pl.CostEstimate(
            flops=int(flops_per_col) * int(p_pad),
            transcendentals=0,
            bytes_accessed=int(4 * (2 * p_pad + C2p * p_pad + lhs.size)),
        ),
    )(coords, lhs)                                                       # (C2p, p_pad)

    out = out[:C2, :P].reshape(C2, N, Hout, Wout)
    out = jnp.transpose(out, (1, 0, 2, 3))                               # (N, C2, Hout, Wout)
    return out[:, :C] + 1j * out[:, C:]


def _reference(x, lr_real, lr_imag):
    """Pure-JAX bilinear grid_sample (align_corners=True, zero padding)."""
    N, Hout, Wout, _ = x.shape
    _, C, H0, W0 = lr_real.shape
    gy = x[..., 0]
    gx = x[..., 1]
    iy = (gy + 1.0) * 0.5 * (H0 - 1)
    ix = (gx + 1.0) * 0.5 * (W0 - 1)
    iy0f = jnp.floor(iy)
    ix0f = jnp.floor(ix)
    wy1 = iy - iy0f
    wy0 = 1.0 - wy1
    wx1 = ix - ix0f
    wx0 = 1.0 - wx1
    iy0 = iy0f.astype(jnp.int32)
    ix0 = ix0f.astype(jnp.int32)
    iy1 = iy0 + 1
    ix1 = ix0 + 1

    def sample(img, iyc, ixc, w):
        valid = (iyc >= 0) & (iyc < H0) & (ixc >= 0) & (ixc < W0)
        iyc_c = jnp.clip(iyc, 0, H0 - 1)
        ixc_c = jnp.clip(ixc, 0, W0 - 1)
        v = img[0][:, iyc_c, ixc_c]                 # (C, N, Hout, Wout)
        return v * (w * valid.astype(w.dtype))[None]

    def one(img):
        out = (sample(img, iy0, ix0, wy0 * wx0)
               + sample(img, iy0, ix1, wy0 * wx1)
               + sample(img, iy1, ix0, wy1 * wx0)
               + sample(img, iy1, ix1, wy1 * wx1))
        return jnp.transpose(out, (1, 0, 2, 3))     # (N, C, Hout, Wout)

    return one(lr_real) + 1j * one(lr_imag)


if __name__ == "__main__":
    key = jax.random.PRNGKey(0)

    # --- Test 1: shipped shapes -> combined-corner (outer-product) MXU path ---
    N, C, H0, W0 = 2, 4, 8, 8
    Hout, Wout = 16, 16
    k_real, k_imag, k_grid, key = jax.random.split(key, 4)
    low_res_real = jax.random.normal(k_real, (1, C, H0, W0), dtype=jnp.float32)
    low_res_imag = jax.random.normal(k_imag, (1, C, H0, W0), dtype=jnp.float32)
    # grid values slightly outside [-1, 1] to exercise zero padding
    x = jax.random.uniform(
        k_grid, (N, Hout, Wout, 2), dtype=jnp.float32, minval=-1.1, maxval=1.1
    )
    out = jax.block_until_ready(grid_sample_complex(x, low_res_real, low_res_imag))
    ref = jax.block_until_ready(_reference(x, low_res_real, low_res_imag))
    assert out.shape == (N, C, Hout, Wout) and out.dtype == jnp.complex64
    assert jnp.allclose(out.real, ref.real, atol=2e-5, rtol=2e-5)
    assert jnp.allclose(out.imag, ref.imag, atol=2e-5, rtol=2e-5)

    # --- Test 2: wide image, few channels -> separable path + channel padding ---
    N2, C_2, H0b, W0b = 2, 2, 8, 32
    Hout2, Wout2 = 12, 12
    k_real2, k_imag2, k_grid2, key = jax.random.split(key, 4)
    lr_real2 = jax.random.normal(k_real2, (1, C_2, H0b, W0b), dtype=jnp.float32)
    lr_imag2 = jax.random.normal(k_imag2, (1, C_2, H0b, W0b), dtype=jnp.float32)
    x2 = jax.random.uniform(
        k_grid2, (N2, Hout2, Wout2, 2), dtype=jnp.float32, minval=-1.1, maxval=1.1
    )
    out2 = jax.block_until_ready(grid_sample_complex(x2, lr_real2, lr_imag2))
    ref2 = jax.block_until_ready(_reference(x2, lr_real2, lr_imag2))
    assert out2.shape == (N2, C_2, Hout2, Wout2) and out2.dtype == jnp.complex64
    assert jnp.allclose(out2.real, ref2.real, atol=2e-5, rtol=2e-5)
    assert jnp.allclose(out2.imag, ref2.imag, atol=2e-5, rtol=2e-5)

    print("KERNEL_OK")
</pallas_src>

<mosaic_0001>
module attributes {stable_mosaic.version = 11 : i64} {
  func.func @_gs_kernel_combined(%arg0: i32, %arg1: memref<2x256xf32, #tpu.memory_space<vmem>>, %arg2: memref<8x64xf32, #tpu.memory_space<vmem>>, %arg3: memref<8x256xf32, #tpu.memory_space<vmem>>) attributes {dimension_semantics = [#tpu.dimension_semantics<parallel>], iteration_bounds = array<i64: 2>, scalar_prefetch = 0 : i64, scratch_operands = 0 : i64, tpu.core_type = #tpu.core_type<tc>, window_params = [{transform_indices = @transform_0, window_bounds = array<i64: 2, 256>}, {pipeline_mode = #tpu.pipeline_mode<synchronous>, transform_indices = @transform_1, window_bounds = array<i64: 8, 64>}, {transform_indices = @transform_2, window_bounds = array<i64: 8, 256>}]} {
    %c0 = arith.constant 0 : index
    %c0_0 = arith.constant 0 : index
    %0 = vector.load %arg1[%c0, %c0_0] : memref<2x256xf32, #tpu.memory_space<vmem>>, vector<1x256xf32>
    %cst = arith.constant 1.000000e+00 : f32
    %1 = vector.broadcast %cst : f32 to vector<1x256xf32>
    %2 = arith.addf %0, %1 : vector<1x256xf32>
    %cst_1 = arith.constant 3.500000e+00 : f32
    %3 = vector.broadcast %cst_1 : f32 to vector<1x256xf32>
    %4 = arith.mulf %2, %3 : vector<1x256xf32>
    %c1 = arith.constant 1 : index
    %c0_2 = arith.constant 0 : index
    %5 = vector.load %arg1[%c1, %c0_2] : memref<2x256xf32, #tpu.memory_space<vmem>>, vector<1x256xf32>
    %cst_3 = arith.constant 1.000000e+00 : f32
    %6 = vector.broadcast %cst_3 : f32 to vector<1x256xf32>
    %7 = arith.addf %5, %6 : vector<1x256xf32>
    %cst_4 = arith.constant 3.500000e+00 : f32
    %8 = vector.broadcast %cst_4 : f32 to vector<1x256xf32>
    %9 = arith.mulf %7, %8 : vector<1x256xf32>
    %10 = tpu.iota {dimensions = array<i32: 0>} : vector<8x256xi32>
    %11 = arith.sitofp %10 : vector<8x256xi32> to vector<8x256xf32>
    %12 = vector.broadcast %4 : vector<1x256xf32> to vector<8x256xf32>
    %13 = arith.subf %11, %12 : vector<8x256xf32>
    %14 = math.absf %13 : vector<8x256xf32>
    %cst_5 = arith.constant 1.000000e+00 : f32
    %15 = vector.broadcast %cst_5 : f32 to vector<8x256xf32>
    %16 = arith.subf %15, %14 : vector<8x256xf32>
    %cst_6 = arith.constant 0.000000e+00 : f32
    %17 = vector.broadcast %cst_6 : f32 to vector<8x256xf32>
    %18 = arith.maximumf %17, %16 : vector<8x256xf32>
    %19 = tpu.iota {dimensions = array<i32: 0>} : vector<8x256xi32>
    %20 = arith.sitofp %19 : vector<8x256xi32> to vector<8x256xf32>
    %21 = vector.broadcast %9 : vector<1x256xf32> to vector<8x256xf32>
    %22 = arith.subf %20, %21 : vector<8x256xf32>
    %23 = math.absf %22 : vector<8x256xf32>
    %cst_7 = arith.constant 1.000000e+00 : f32
    %24 = vector.broadcast %cst_7 : f32 to vector<8x256xf32>
    %25 = arith.subf %24, %23 : vector<8x256xf32>
    %cst_8 = arith.constant 0.000000e+00 : f32
    %26 = vector.broadcast %cst_8 : f32 to vector<8x256xf32>
    %27 = arith.maximumf %26, %25 : vector<8x256xf32>
    %28 = vector.shape_cast %18 : vector<8x256xf32> to vector<8x1x256xf32>
    %29 = vector.shape_cast %27 : vector<8x256xf32> to vector<1x8x256xf32>
    %30 = vector.broadcast %28 : vector<8x1x256xf32> to vector<8x8x256xf32>
    %31 = vector.broadcast %29 : vector<1x8x256xf32> to vector<8x8x256xf32>
    %32 = arith.mulf %30, %31 : vector<8x8x256xf32>
    %33 = vector.shape_cast %32 : vector<8x8x256xf32> to vector<64x256xf32>
    %c0_9 = arith.constant 0 : index
    %c0_10 = arith.constant 0 : index
    %34 = vector.load %arg2[%c0_9, %c0_10] : memref<8x64xf32, #tpu.memory_space<vmem>>, vector<8x64xf32>
    %cst_11 = arith.constant dense<0.000000e+00> : vector<8x256xf32>
    %35 = tpu.matmul %34, %33, %cst_11 {dimension_numbers = #tpu.dot_dimension_numbers<[1], [0], [0], [1], [0, 0, 1, 1], [], []>} : vector<8x64xf32>, vector<64x256xf32>, vector<8x256xf32> -> vector<8x256xf32>
    %c0_12 = arith.constant 0 : index
    %c0_13 = arith.constant 0 : index
    %36 = vector.load %arg3[%c0_12, %c0_13] : memref<8x256xf32, #tpu.memory_space<vmem>>, vector<8x256xf32>
    tpu.vector_store %arg3[%c0_12, %c0_13], %35 {strides = array<i32>} : memref<8x256xf32, #tpu.memory_space<vmem>>, vector<8x256xf32>,
    return
  }
  func.func @transform_0(%arg0: i32) -> (i32, i32) {
    %c0_i32 = arith.constant 0 : i32
    %c0_i32_0 = arith.constant 0 : i32
    return %c0_i32, %arg0 : i32, i32
  }
  func.func @transform_1(%arg0: i32) -> (i32, i32) {
    %c0_i32 = arith.constant 0 : i32
    %c0_i32_0 = arith.constant 0 : i32
    %c0_i32_1 = arith.constant 0 : i32
    return %c0_i32, %c0_i32_0 : i32, i32
  }
  func.func @transform_2(%arg0: i32) -> (i32, i32) {
    %c0_i32 = arith.constant 0 : i32
    %c0_i32_0 = arith.constant 0 : i32
    return %c0_i32, %arg0 : i32, i32
  }
}

</mosaic_0001>

<llo_original>
// kernel: tpu_custom_call.1
$region0: #{tpu_custom_call.1}
  #allocation0 [shape = 'u32[]', space=smem, size = 0x4, offset = 0x4, fixed_abs, tag = 'smem constant byte address 0x4 - core index']
  #allocation1 [shape = 'u32[144,128]{1,0:T(1,128)}', space=vmem, size = 0x12000, scoped, tag = 'internal scratch']
  %s0 = inlined_call_operand.hbm [shape: f32[2,512], index: 0, kind: input, shape index: {}]
  %s1 = inlined_call_operand.hbm [shape: f32[8,64], index: 1, kind: input, shape index: {}]
  %s2 = inlined_call_operand.hbm [shape: f32[8,512], index: 2, kind: output, shape index: {}]
  %s3 = sld [smem:[#allocation0]]
  $region49: #{tpu_custom_call.1} parent=0
    _
  %s5 = ssub.s32 1, %s3
  %s6 = scalar_select 0, %s5, %s3
  $region1: #{tpu_custom_call.1} parent=0
    #allocation2 [shape = 'u8[4096]{0}', space=vmem, size = 0x1000, scoped, tag = 'input window, operand 0']
    #allocation3 [shape = 's32[2]{0}', space=sflag, size = 0x8, scoped, tag = 'scoped memory for tpu_custom_call.1']
    #allocation4 [shape = 's32[2]{0}', space=sflag, size = 0x8, scoped, tag = 'scoped memory for tpu_custom_call.1']
    #allocation5 [shape = 'u8[4096]{0}', space=vmem, size = 0x1000, scoped, tag = 'input window, operand 1, single buffered']
    #allocation6 [shape = 's32[1]{0}', space=sflag, size = 0x4, scoped, tag = 'scoped memory for tpu_custom_call.1']
    #allocation7 [shape = 'u8[16384]{0}', space=vmem, size = 0x4000, scoped, tag = 'output window, operand 0']
    %7 = vsyncpa [#allocation3], 0
    %s8 = scalar_lea.sflag [#allocation3], 1
    %9 = vsyncpa %s8, 0
    %10 = vsyncpa [#allocation6], 0
    %11 = vsyncpa [#allocation4], 0
    %s12 = scalar_lea.sflag [#allocation4], 1
    %13 = vsyncpa %s12, 0
    loop: start=0, step=1, limit=4
    $region2: #{tpu_custom_call.1} parent=1 // loop_pre_header
      _
    $region3: #{tpu_custom_call.1} parent=1 // loop_header
      %s15 = sphi 0, %s19
      %p16 = scmp.ge.s32.totalorder %s15, 4
      %s25 = sphi 0, %s27
      %s28 = sphi 0, %s25
      %s29 = sphi 0, %s28
      %s45 = sphi 0, %s29
      %s49 = sphi 0, %s49
      %s51 = sphi 0, %s49
      %s52 = sphi 0, %s51
      %s66 = sphi 0, %s52
      %s72 = sphi 0, %s74
      %s75 = sphi 0, %s72
      %s76 = sphi 0, %s75
      %s92 = sphi 0, %s76
    $region4: #{tpu_custom_call.1} parent=1 // loop_header_branch
      %18 = sbr.rel (%p16) target = $region8
    $region5: #{tpu_custom_call.1} parent=1 // loop_body
      %s20 = ssub.s32 %s15, 1
      %s21 = ssub.s32 %s15, 2
      %s22 = sadd.s32 %s15, 1
      %s23 = ssub.s32 %s15, %s22
      %p24 = scmp.eq.s32.totalorder %s23, 0
      %s26 = sadd.s32 %s25, 1
      %s27 = scalar_select %p24, %s25, %s26
      %p30 = pneg %p24
      %p31 = scmp.eq.s32.totalorder %s15, 1
      %p32 = por %p30, %p31
      %p33 = scmp.ne.s32.totalorder %s25, %s28
      %p34 = scmp.eq.s32.totalorder %s15, 0
      %p35 = por %p33, %p34
      %p36 = scmp.ne.s32.totalorder %s25, %s28
      %p37 = scmp.eq.s32.totalorder %s20, 1
      %p38 = por %p36, %p37
      %p39 = scmp.ne.s32.totalorder %s28, %s29
      %p40 = scmp.eq.s32.totalorder %s20, 0
      %p41 = por %p39, %p40
      %p42 = scmp.ne.s32.totalorder %s28, %s29
      %p43 = scmp.eq.s32.totalorder %s21, 1
      %p44 = por %p42, %p43
      %p46 = scmp.ne.s32.totalorder %s29, %s45
      %p47 = scmp.eq.s32.totalorder %s21, 0
      %p48 = por %p46, %p47
      %s50 = sadd.s32 %s49, 1
      %p53 = scmp.eq.s32.totalorder %s15, 1
      %p54 = scmp.ne.s32.totalorder %s49, %s51
      %p55 = scmp.eq.s32.totalorder %s15, 0
      %p56 = por %p54, %p55
      %p57 = scmp.ne.s32.totalorder %s49, %s51
      %p58 = scmp.eq.s32.totalorder %s20, 1
      %p59 = por %p57, %p58
      %p60 = scmp.ne.s32.totalorder %s51, %s52
      %p61 = scmp.eq.s32.totalorder %s20, 0
      %p62 = por %p60, %p61
      %p63 = scmp.ne.s32.totalorder %s51, %s52
      %p64 = scmp.eq.s32.totalorder %s21, 1
      %p65 = por %p63, %p64
      %p67 = scmp.ne.s32.totalorder %s52, %s66
      %p68 = scmp.eq.s32.totalorder %s21, 0
      %p69 = por %p67, %p68
      %s70 = ssub.s32 %s15, %s22
      %p71 = scmp.eq.s32.totalorder %s70, 0
      %s73 = sadd.s32 %s72, 1
      %s74 = scalar_select %p71, %s72, %s73
      %p77 = pneg %p71
      %p78 = scmp.eq.s32.totalorder %s15, 1
      %p79 = por %p77, %p78
      %p80 = scmp.ne.s32.totalorder %s72, %s75
      %p81 = scmp.eq.s32.totalorder %s15, 0
      %p82 = por %p80, %p81
      %p83 = scmp.ne.s32.totalorder %s72, %s75
      %p84 = scmp.eq.s32.totalorder %s20, 1
      %p85 = por %p83, %p84
      %p86 = scmp.ne.s32.totalorder %s75, %s76
      %p87 = scmp.eq.s32.totalorder %s20, 0
      %p88 = por %p86, %p87
      %p89 = scmp.ne.s32.totalorder %s75, %s76
      %p90 = scmp.eq.s32.totalorder %s21, 1
      %p91 = por %p89, %p90
      %p93 = scmp.ne.s32.totalorder %s76, %s92
      %p94 = scmp.eq.s32.totalorder %s21, 0
      %p95 = por %p93, %p94
      %p96 = scmp.le.s32.totalorder 1, %s15
      %p97 = scmp.lt.s32.totalorder %s15, 3
      %p98 = pnand %p96, %p97
      %p99 = pneg %p98
      // Predicated region
      $region9: #{tpu_custom_call.1} parent=5 // pred_check
        _
      $region10: #{tpu_custom_call.1} parent=5 // pred_check_branch
        %101 = sbr.rel (%p98) target = $region12
      $region11: #{tpu_custom_call.1} parent=5 // pred_region
        %s102 = ssub.s32 %s15, 1
        // Predicated region
        $region13: #{tpu_custom_call.1} parent=11 // pred_check
          %p103 = pneg %p62
        $region14: #{tpu_custom_call.1} parent=11 // pred_check_branch
          %105 = sbr.rel (%p103) target = $region16
        $region15: #{tpu_custom_call.1} parent=11 // pred_region
          %s107 = ssub.s32 128, 128
          %108 = vsyncadd [#allocation6], %s107
          %s110 = sshll.u32 [#allocation5], 4
          %s111 = int_to_ptr.vmem [resolvable:$true] %s110
          %113 = dma.hbm_to_vmem [thread:$0]  %s1, 128, %s111, [#allocation6]
        $region16: #{tpu_custom_call.1} parent=11 // pred_fallthru
          _
      $region12: #{tpu_custom_call.1} parent=5 // pred_fallthru
        _
      %p114 = scmp.lt.s32.totalorder %s15, 2
      // Predicated region
      $region17: #{tpu_custom_call.1} parent=5 // pred_check
        %p115 = pneg %p114
      $region18: #{tpu_custom_call.1} parent=5 // pred_check_branch
        %117 = sbr.rel (%p115) target = $region20
      $region19: #{tpu_custom_call.1} parent=5 // pred_region
        // Predicated region
        $region21: #{tpu_custom_call.1} parent=19 // pred_check
          %p118 = pneg %p35
        $region22: #{tpu_custom_call.1} parent=19 // pred_check_branch
          %120 = sbr.rel (%p118) target = $region24
        $region23: #{tpu_custom_call.1} parent=19 // pred_region
          %s121 = sand.u32 %s25, 1
          %s122 = scalar_lea.sflag [#allocation3], %s121
          %s123 = sand.u32 %s25, 1
          %s124 = smul.addr %s123, 4
          %s125 = scalar_lea.vmem [#allocation2], %s124
          %s126 = smul.u32 2, %s15
          %s128 = ssub.s32 64, 64
          %129 = vsyncadd %s122, %s128
          %s130 = smul.addr %s126, 32
          %s131 = scalar_lea.hbm %s0, %s130
          %s133 = sshll.u32 %s125, 4
          %s134 = int_to_ptr.vmem [resolvable:$true] %s133
          %136 = dma.hbm_to_vmem [thread:$0]  %s131, 64, %s134, %s122
        $region24: #{tpu_custom_call.1} parent=19 // pred_fallthru
          _
      $region20: #{tpu_custom_call.1} parent=5 // pred_fallthru
        _
      %p137 = scmp.le.s32.totalorder 1, %s15
      %p138 = scmp.lt.s32.totalorder %s15, 3
      %p139 = pnand %p137, %p138
      %p140 = pneg %p139
      // Predicated region
      $region25: #{tpu_custom_call.1} parent=5 // pred_check
        _
      $region26: #{tpu_custom_call.1} parent=5 // pred_check_branch
        %142 = sbr.rel (%p139) target = $region28
      $region27: #{tpu_custom_call.1} parent=5 // pred_region
        %s143 = ssub.s32 %s15, 1
        %s144 = sand.u32 %s28, 1
        %s145 = scalar_lea.sflag [#allocation3], %s144
        %s146 = sand.u32 %s28, 1
        %s147 = smul.addr %s146, 4
        %s148 = scalar_lea.vmem [#allocation2], %s147
        // Predicated region
        $region29: #{tpu_custom_call.1} parent=27 // pred_check
          %p149 = pneg %p41
        $region30: #{tpu_custom_call.1} parent=27 // pred_check_branch
          %151 = sbr.rel (%p149) target = $region32
        $region31: #{tpu_custom_call.1} parent=27 // pred_region
          %152 = dma.done %s145, 64
        $region32: #{tpu_custom_call.1} parent=27 // pred_fallthru
          _
        // Predicated region
        $region33: #{tpu_custom_call.1} parent=27 // pred_check
          %p153 = pneg %p62
        $region34: #{tpu_custom_call.1} parent=27 // pred_check_branch
          %155 = sbr.rel (%p153) target = $region36
        $region35: #{tpu_custom_call.1} parent=27 // pred_region
          %156 = dma.done [#allocation6], 128
        $region36: #{tpu_custom_call.1} parent=27 // pred_fallthru
          _
        %s157 = sand.u32 %s28, 1
        %s158 = scalar_lea.sflag [#allocation3], %s157
        %s159 = sand.u32 %s28, 1
        %s160 = smul.addr %s159, 4
        %s161 = scalar_lea.vmem [#allocation2], %s160
        %p162 = pneg %p41
        %p163 = pneg %p38
        %p164 = pneg %p62
        %p165 = pneg %p59
        %p166 = pneg %p88
        %p167 = pneg %p85
        %s168 = sand.u32 %s75, 1
        %s169 = scalar_lea.sflag [#allocation4], %s168
        %s170 = sand.u32 %s75, 1
        %s171 = smul.addr %s170, 16
        %s172 = scalar_lea.vmem [#allocation7], %s171
        %s173 = smul.u32 2, %s20
        %s174 = smul.u32 2, %s20
        %v175 = vld [vmem:[%s148] ss:$2 sm:$0x3]
        %v176 = vadd.f32 %v175, 1.0
        %v177 = vmul.f32 %v176, 3.5
        %s178 = scalar_lea.vmem %s148, 1 [#allocation2]
        %v179 = vld [vmem:[%s178] ss:$2 sm:$0x3]
        %v180 = vadd.f32 %v179, 1.0
        %v181 = vmul.f32 %v180, 3.5
        %v182 = vlaneseq
        %v183 = vshrl.u32 %v182, 7
        %v184 = vcvt.s32.f32 %v183
        %v186 = vlaneseq
        %v187 = vshrl.u32 %v186, 7
        %v188 = vsub.s32 0, %v187
        %v189 = vrot.slane %v177, %v188
        %v190 = vlaneseq
        %v191 = vshrl.u32 %v190, 7
        %v192 = vsub.s32 1, %v191
        %v193 = vrot.slane %v177, %v192
        %v196 = vsub.f32 %v184, %v189
        %v197 = vsub.f32 %v184, %v193
        %v198 = vand.u32 2147483647, %v196
        %v199 = vand.u32 2147483647, %v197
        %v200 = vsub.f32 1.0, %v198
        %v201 = vsub.f32 1.0, %v199
        %v202 = vmax.f32 %v200, 0.0
        %v203 = vmax.f32 %v201, 0.0
        %v205 = vlaneseq
        %v206 = vshrl.u32 %v205, 7
        %v207 = vsub.s32 0, %v206
        %v208 = vrot.slane %v181, %v207
        %v209 = vlaneseq
        %v210 = vshrl.u32 %v209, 7
        %v211 = vsub.s32 1, %v210
        %v212 = vrot.slane %v181, %v211
        %v215 = vsub.f32 %v184, %v208
        %v216 = vsub.f32 %v184, %v212
        %v217 = vand.u32 2147483647, %v215
        %v218 = vand.u32 2147483647, %v216
        %v219 = vsub.f32 1.0, %v217
        %v220 = vsub.f32 1.0, %v218
        %v221 = vmax.f32 %v219, 0.0
        %v222 = vmax.f32 %v220, 0.0
        %v225 = vcombine.low %v202, %v203
        %v226 = vcombine.high %v202, %v203
        %v228 = vunpack.c.l.s4 1966171168
        %v229 = vunpack.c.0.s8 %v228
        %v230 = vlaneseq
        %v231 = vshrl.u32 %v230, 7
        %v232 = vsub.s32 %v229, %v231
        %v233 = vrot.slane %v225, %v232
        %v235 = vunpack.c.l.s4 1966171168
        %v236 = vunpack.c.0.s8 %v235
        %v237 = vlaneseq
        %v238 = vshrl.u32 %v237, 7
        %v239 = vsub.s32 %v236, %v238
        %v240 = vrot.slane %v226, %v239
        %v241 = vcombine.high %v233, %v233
        %v242 = vcombine.high %v240, %v240
        %v244 = vunpack.c.l.s4 1966171168
        %v245 = vunpack.c.0.s8 %v244
        %v246 = vlaneseq
        %v247 = vshrl.u32 %v246, 7
        %v248 = vsub.s32 %v245, %v247
        %v249 = vrot.slane %v233, %v248
        %v251 = vunpack.c.l.s4 1966171168
        %v252 = vunpack.c.0.s8 %v251
        %v253 = vlaneseq
        %v254 = vshrl.u32 %v253, 7
        %v255 = vsub.s32 %v252, %v254
        %v256 = vrot.slane %v240, %v255
        %v258 = vunpack.c.l.s4 1966171168
        %v259 = vunpack.c.0.s8 %v258
        %v260 = vlaneseq
        %v261 = vshrl.u32 %v260, 7
        %v262 = vsub.s32 %v259, %v261
        %v263 = vrot.slane %v241, %v262
        %v265 = vunpack.c.l.s4 1966171168
        %v266 = vunpack.c.0.s8 %v265
        %v267 = vlaneseq
        %v268 = vshrl.u32 %v267, 7
        %v269 = vsub.s32 %v266, %v268
        %v270 = vrot.slane %v242, %v269
        %v271 = vcombine.high %v249, %v249
        %v272 = vcombine.high %v256, %v256
        %v273 = vcombine.high %v263, %v263
        %v274 = vcombine.high %v270, %v270
        %v275 = vlaneseq
        %v276 = vshrl.u32 %v275, 7
        %v277 = vsub.s32 0, %v276
        %v278 = vrot.slane %v249, %v277
        %v279 = vlaneseq
        %v280 = vshrl.u32 %v279, 7
        %v281 = vsub.s32 1, %v280
        %v282 = vrot.slane %v249, %v281
        %v283 = vlaneseq
        %v284 = vshrl.u32 %v283, 7
        %v285 = vsub.s32 0, %v284
        %v286 = vrot.slane %v263, %v285
        %v287 = vlaneseq
        %v288 = vshrl.u32 %v287, 7
        %v289 = vsub.s32 1, %v288
        %v290 = vrot.slane %v263, %v289
        %v291 = vlaneseq
        %v292 = vshrl.u32 %v291, 7
        %v293 = vsub.s32 0, %v292
        %v294 = vrot.slane %v271, %v293
        %v295 = vlaneseq
        %v296 = vshrl.u32 %v295, 7
        %v297 = vsub.s32 1, %v296
        %v298 = vrot.slane %v271, %v297
        %v299 = vlaneseq
        %v300 = vshrl.u32 %v299, 7
        %v301 = vsub.s32 0, %v300
        %v302 = vrot.slane %v273, %v301
        %v303 = vlaneseq
        %v304 = vshrl.u32 %v303, 7
        %v305 = vsub.s32 1, %v304
        %v306 = vrot.slane %v273, %v305
        %v307 = vlaneseq
        %v308 = vshrl.u32 %v307, 7
        %v309 = vsub.s32 0, %v308
        %v310 = vrot.slane %v256, %v309
        %v311 = vlaneseq
        %v312 = vshrl.u32 %v311, 7
        %v313 = vsub.s32 1, %v312
        %v314 = vrot.slane %v256, %v313
        %v315 = vlaneseq
        %v316 = vshrl.u32 %v315, 7
        %v317 = vsub.s32 0, %v316
        %v318 = vrot.slane %v270, %v317
        %v319 = vlaneseq
        %v320 = vshrl.u32 %v319, 7
        %v321 = vsub.s32 1, %v320
        %v322 = vrot.slane %v270, %v321
        %v323 = vlaneseq
        %v324 = vshrl.u32 %v323, 7
        %v325 = vsub.s32 0, %v324
        %v326 = vrot.slane %v272, %v325
        %v327 = vlaneseq
        %v328 = vshrl.u32 %v327, 7
        %v329 = vsub.s32 1, %v328
        %v330 = vrot.slane %v272, %v329
        %v331 = vlaneseq
        %v332 = vshrl.u32 %v331, 7
        %v333 = vsub.s32 0, %v332
        %v334 = vrot.slane %v274, %v333
        %v335 = vlaneseq
        %v336 = vshrl.u32 %v335, 7
        %v337 = vsub.s32 1, %v336
        %v338 = vrot.slane %v274, %v337
        %v355 = vmul.f32 %v278, %v221
        %v356 = vmul.f32 %v282, %v222
        %v357 = vmul.f32 %v286, %v221
        %v358 = vmul.f32 %v290, %v222
        %v359 = vmul.f32 %v294, %v221
        %v360 = vmul.f32 %v298, %v222
        %v361 = vmul.f32 %v302, %v221
        %v362 = vmul.f32 %v306, %v222
        %v363 = vmul.f32 %v310, %v221
        %v364 = vmul.f32 %v314, %v222
        %v365 = vmul.f32 %v318, %v221
        %v366 = vmul.f32 %v322, %v222
        %v367 = vmul.f32 %v326, %v221
        %v368 = vmul.f32 %v330, %v222
        %v369 = vmul.f32 %v334, %v221
        %v370 = vmul.f32 %v338, %v222
        %v371 = vld [vmem:[#allocation5] sm:$0xff]
        %vm372 = vcmask 523264
        %v374 = vsel %vm372, %v371, 0
        %376 = vmatprep.subr.mxu0 %v356
        %377 = vmatpush1.msra.mxu0 %v355
        %378 = vmatprep.subr.mxu0 %v358
        %379 = vmatpush1.msra.mxu0 %v357
        %380 = vmatprep.subr.mxu0 %v360
        %381 = vmatpush1.msra.mxu0 %v359
        %382 = vmatprep.subr.mxu0 %v362
        %383 = vmatpush1.msra.mxu0 %v361
        %384 = vmatprep.subr.mxu0 %v364
        %385 = vmatpush1.msra.mxu0 %v363
        %386 = vmatprep.subr.mxu0 %v366
        %387 = vmatpush1.msra.mxu0 %v365
        %388 = vmatprep.subr.mxu0 %v368
        %389 = vmatpush1.msra.mxu0 %v367
        %390 = vmatprep.subr.mxu0 %v370
        %391 = vmatpush1.msra.mxu0 %v369
        %392 = vmatprep.subr.mxu0 0.0
        %393 = vmatpush1.msra.mxu0 0.0
        %394 = vmatprep.subr.mxu0 0.0
        %395 = vmatpush1.msra.mxu0 0.0
        %396 = vmatprep.subr.mxu0 0.0
        %397 = vmatpush1.msra.mxu0 0.0
        %398 = vmatprep.subr.mxu0 0.0
        %399 = vmatpush1.msra.mxu0 0.0
        %400 = vmatprep.subr.mxu0 0.0
        %401 = vmatpush1.msra.mxu0 0.0
        %402 = vmatprep.subr.mxu0 0.0
        %403 = vmatpush1.msra.mxu0 0.0
        %404 = vmatprep.subr.mxu0 0.0
        %405 = vmatpush1.msra.mxu0 0.0
        %406 = vmatprep.subr.mxu0 0.0
        %407 = vmatpush1.msra.mxu0 0.0
        %408 = vmatprep.subr.mxu0 0.0
        %409 = vmatpush1.msra.mxu0 0.0
        %410 = vmatprep.subr.mxu0 0.0
        %411 = vmatpush1.msra.mxu0 0.0
        %412 = vmatprep.subr.mxu0 0.0
        %413 = vmatpush1.msra.mxu0 0.0
        %414 = vmatprep.subr.mxu0 0.0
        %415 = vmatpush1.msra.mxu0 0.0
        %416 = vmatprep.subr.mxu0 0.0
        %417 = vmatpush1.msra.mxu0 0.0
        %418 = vmatprep.subr.mxu0 0.0
        %419 = vmatpush1.msra.mxu0 0.0
        %420 = vmatprep.subr.mxu0 0.0
        %421 = vmatpush1.msra.mxu0 0.0
        %422 = vmatprep.subr.mxu0 0.0
        %423 = vmatpush1.msra.mxu0 0.0
        %424 = vmatprep.subr.mxu0 0.0
        %425 = vmatpush1.msra.mxu0 0.0
        %426 = vmatprep.subr.mxu0 0.0
        %427 = vmatpush1.msra.mxu0 0.0
        %428 = vmatprep.subr.mxu0 0.0
        %429 = vmatpush1.msra.mxu0 0.0
        %430 = vmatprep.subr.mxu0 0.0
        %431 = vmatpush1.msra.mxu0 0.0
        %432 = vmatprep.subr.mxu0 0.0
        %433 = vmatpush1.msra.mxu0 0.0
        %434 = vmatprep.subr.mxu0 0.0
        %435 = vmatpush1.msra.mxu0 0.0
        %436 = vmatprep.subr.mxu0 0.0
        %437 = vmatpush1.msra.mxu0 0.0
        %438 = vmatprep.subr.mxu0 0.0
        %439 = vmatpush1.msra.mxu0 0.0
        %440 = vmatprep.mubr.f32.mxu0 0.0
        %441 = vmatmul.mubr.f32.gmra.mrb[0].mxu0 %v374
        %v442 = vpop.f32.mrb[0].mxu0
        %v443 = vadd.f32 0.0, %v442
        %v444 = vpop.f32.mrb[0].mxu0
        %v445 = vadd.f32 0.0, %v444
        %446 = vdwg.mxu0
        %447 = vst [vmem:[%s172] sm:$0xff] %v443
        %448 = vst [vmem:[%s172 + $0x8] sm:$0xff] %v445
        %s449 = sand.u32 %s75, 1
        %s450 = scalar_lea.sflag [#allocation4], %s449
        %s451 = sand.u32 %s75, 1
        %s452 = smul.addr %s451, 16
        %s453 = scalar_lea.vmem [#allocation7], %s452
        // Predicated region
        $region37: #{tpu_custom_call.1} parent=27 // pred_check
          %p454 = pneg %p85
        $region38: #{tpu_custom_call.1} parent=27 // pred_check_branch
          %456 = sbr.rel (%p454) target = $region40
        $region39: #{tpu_custom_call.1} parent=27 // pred_region
          %s457 = smul.u32 2, %s20
          %s459 = ssub.s32 256, 256
          %460 = vsyncadd %s450, %s459
          %s461 = smul.addr %s457, 128
          %s462 = scalar_lea.hbm %s2, %s461
          %s464 = sshll.u32 %s453, 4
          %s465 = int_to_ptr.vmem [resolvable:$true] %s464
          %467 = dma.vmem_to_hbm [thread:$0]  %s465, 256, %s462, %s450
        $region40: #{tpu_custom_call.1} parent=27 // pred_fallthru
          _
      $region28: #{tpu_custom_call.1} parent=5 // pred_fallthru
        _
      %p468 = scmp.le.s32.totalorder 2, %s15
      // Predicated region
      $region41: #{tpu_custom_call.1} parent=5 // pred_check
        %p469 = pneg %p468
      $region42: #{tpu_custom_call.1} parent=5 // pred_check_branch
        %471 = sbr.rel (%p469) target = $region44
      $region43: #{tpu_custom_call.1} parent=5 // pred_region
        %s472 = ssub.s32 %s15, 2
        // Predicated region
        $region45: #{tpu_custom_call.1} parent=43 // pred_check
          %p473 = pneg %p91
        $region46: #{tpu_custom_call.1} parent=43 // pred_check_branch
          %475 = sbr.rel (%p473) target = $region48
        $region47: #{tpu_custom_call.1} parent=43 // pred_region
          %s476 = sand.u32 %s76, 1
          %s477 = scalar_lea.sflag [#allocation4], %s476
          %s478 = sand.u32 %s76, 1
          %s479 = smul.addr %s478, 16
          %s480 = scalar_lea.vmem [#allocation7], %s479
          %481 = dma.done %s477, 256
        $region48: #{tpu_custom_call.1} parent=43 // pred_fallthru
          _
      $region44: #{tpu_custom_call.1} parent=5 // pred_fallthru
        _
    $region6: #{tpu_custom_call.1} parent=1 // loop_footer
      %s19 = sadd.s32 1, %s15
    $region7: #{tpu_custom_call.1} parent=1 // loop_footer_branch
      %14 = sbr.rel target = $region3
    $region8: #{tpu_custom_call.1} parent=1 // loop_exit
      _
    %482 = vsyncpa [#allocation3], 1
    %s483 = scalar_lea.sflag [#allocation3], 1
    %484 = vsyncpa %s483, 1
    %485 = vsyncpa [#allocation6], 1
    %486 = vsyncpa [#allocation4], 1
    %s487 = scalar_lea.sflag [#allocation4], 1
    %488 = vsyncpa %s487, 1

</llo_original>
